<compile_context>
chip_gen: v6e
topology: v6e:2x2x1
jax: 0.10.0
libtpu: 0.0.40
codegen_flags: <defaults>
</compile_context>

<pallas_src>
import jax
import jax.numpy as jnp
from jax.experimental import pallas as pl
from jax.experimental.pallas import tpu as pltpu


# ----------------------------------------------------------------------------
# Model hyper-parameters (small but consistent with the module's arithmetic:
#   hop_length   = n_fft // 4
#   fft_feat_dim = (n_fft // 2 + 1) * 2 )
# ----------------------------------------------------------------------------
INP_LEN = 70
N_FFT = 64
NEURONS = 32
HOP_LENGTH = N_FFT // 4                    # 16
FFT_FEAT_DIM = (N_FFT // 2 + 1) * 2        # 66

K_PAD = 128          # padded feat width (inp_len 70 -> 128)
F_PAD = 128          # padded hidden / output width (everything <= 128)
Y_LANE_OFF = 80      # tanh head placed at lanes [80, 96) of the output slab
N_WEIGHTS = 5

BATCH = 16
LEAKY_SLOPE = 0.01                         # torch.nn.LeakyReLU default


def _leaky_relu(x):
    return jnp.where(x > 0, x, LEAKY_SLOPE * x)


def _round_up(x, m):
    return (x + m - 1) // m * m


# ----------------------------------------------------------------------------
# Kernel
# ----------------------------------------------------------------------------
def _make_kernel(bm, split):
    """Build the fused forward kernel for a batch tile of `bm` rows."""

    def chain(feat_bf16, w_ref, b_ref):
        # linear1: Linear -> LeakyReLU -> Linear -> LeakyReLU
        h = _leaky_relu(
            jnp.dot(feat_bf16, w_ref[0], preferred_element_type=jnp.float32)
            + b_ref[0:1, :])
        x = _leaky_relu(
            jnp.dot(h.astype(jnp.bfloat16), w_ref[1],
                    preferred_element_type=jnp.float32) + b_ref[1:2, :])
        # linear2 + residual
        h2 = _leaky_relu(
            jnp.dot(x.astype(jnp.bfloat16), w_ref[2],
                    preferred_element_type=jnp.float32) + b_ref[2:3, :])
        x2 = _leaky_relu(
            jnp.dot(h2.astype(jnp.bfloat16), w_ref[3],
                    preferred_element_type=jnp.float32) + b_ref[3:4, :])
        stft = x2 + x
        # sigmoid(learnt_win) gate is folded into w5; w5/b5 are pre-placed at
        # lanes [Y_LANE_OFF, Y_LANE_OFF+HOP_LENGTH), disjoint from stft lanes.
        y = jnp.tanh(
            jnp.dot(stft.astype(jnp.bfloat16), w_ref[4],
                    preferred_element_type=jnp.float32) + b_ref[4:5, :])
        return stft + y    # lane-disjoint merge: [stft | 0 | tanh-head | 0]

    def kernel(feat_ref, w_ref, b_ref, out_ref):
        if split:
            # Two independent dependency chains -> MXU/VPU/EUP interleave.
            half = bm // 2
            out_ref[0:half, :] = chain(feat_ref[0:half, :], w_ref, b_ref)
            out_ref[half:bm, :] = chain(feat_ref[half:bm, :], w_ref, b_ref)
        else:
            out_ref[...] = chain(feat_ref[...], w_ref, b_ref)

    return kernel


# ----------------------------------------------------------------------------
# Parameter packing (wrapper side)
# ----------------------------------------------------------------------------
def _embed_w(w, r_off, c_off):
    out = jnp.zeros((128, 128), jnp.float32)
    return out.at[r_off:r_off + w.shape[0], c_off:c_off + w.shape[1]].set(w)


def _embed_b(b, off):
    b = b.reshape(-1)
    out = jnp.zeros((128,), jnp.float32)
    return out.at[off:off + b.shape[0]].set(b)


def _prepare_packed_params(params):
    """Pack all weights into one bf16 (5,128,128) slab and biases into (8,128)."""
    (w1a, b1a, w1b, b1b, w2a, b2a, w2b, b2b, win, w5, b5) = params

    # Fold the per-feature sigmoid gate into the final weight (exact algebra).
    w5_eff = jax.nn.sigmoid(win).reshape(-1, 1) * w5      # (66, 16)

    W = jnp.stack([
        _embed_w(w1a, 0, 0),                   # (70, 32)  -> [0:70, 0:32]
        _embed_w(w1b, 0, 0),                   # (32, 66)
        _embed_w(w2a, 0, 0),                   # (66, 32)
        _embed_w(w2b, 0, 0),                   # (32, 66)
        _embed_w(w5_eff, 0, Y_LANE_OFF),       # (66, 16)  -> cols [80:96]
    ]).astype(jnp.bfloat16)                    # (5, 128, 128) bf16

    Bv = jnp.stack([
        _embed_b(b1a, 0),
        _embed_b(b1b, 0),
        _embed_b(b2a, 0),
        _embed_b(b2b, 0),
        _embed_b(b5, Y_LANE_OFF),
        jnp.zeros((128,), jnp.float32),
        jnp.zeros((128,), jnp.float32),
        jnp.zeros((128,), jnp.float32),
    ]).astype(jnp.float32)                     # (8, 128) f32

    return W, Bv


# ----------------------------------------------------------------------------
# Wrapper
# ----------------------------------------------------------------------------
def ra_model_pallas(feat, params):
    """feat: (B, inp_len) float32 (any leading layout is flattened, as in torch)."""
    feat = feat.reshape(feat.shape[0], -1)
    B, inp = feat.shape
    assert inp == INP_LEN

    # ---- batch tiling: always pad B up to a multiple of the tile ----
    if B <= 256:
        bm = max(16, _round_up(B, 16))                 # single fat tile
    elif B <= 2048:
        bm = _round_up((B + 1) // 2, 128)              # 2 tiles (both v7x TCs)
    else:
        bm = 1024                                      # big-batch tiles
    B_pad = _round_up(B, bm)
    n_steps = B_pad // bm
    split = (bm % 32 == 0) and (bm <= 512)             # 2-chain interleave

    # ---- lane-dense bf16 feat (pad rows to B_pad, cols 70 -> 128) ----
    feat_p = jnp.pad(feat, ((0, B_pad - B), (0, K_PAD - inp))).astype(jnp.bfloat16)

    W, Bv = _prepare_packed_params(params)

    # ---- explicit VMEM budget (double-buffered I/O + compute headroom) ----
    io_bytes = (bm * K_PAD * 2        # feat tile (bf16)
                + bm * F_PAD * 4      # output tile (f32)
                + W.size * 2          # packed weights (bf16)
                + Bv.size * 4)        # packed biases (f32)
    vmem_limit = int(2 * io_bytes + (16 << 20))

    grid_spec = pltpu.PrefetchScalarGridSpec(
        num_scalar_prefetch=0,
        grid=(n_steps,),
        in_specs=[
            pl.BlockSpec((bm, K_PAD), lambda i: (i, 0)),            # feat
            pl.BlockSpec((N_WEIGHTS, 128, 128), lambda i: (0, 0, 0)),  # weights
            pl.BlockSpec((8, 128), lambda i: (0, 0)),               # biases
        ],
        out_specs=pl.BlockSpec((bm, F_PAD), lambda i: (i, 0)),      # merged out
    )

    dims = ("parallel",) if n_steps > 1 else ("arbitrary",)

    out = pl.pallas_call(
        _make_kernel(bm, split),
        out_shape=jax.ShapeDtypeStruct((B_pad, F_PAD), jnp.float32),
        grid_spec=grid_spec,
        compiler_params=pltpu.CompilerParams(
            dimension_semantics=dims,
            vmem_limit_bytes=vmem_limit),
    )(feat_p, W, Bv)

    # Strip batch/lane padding and un-merge the two outputs outside the kernel.
    stft = out[:B, :FFT_FEAT_DIM]
    x = out[:B, Y_LANE_OFF:Y_LANE_OFF + HOP_LENGTH]
    return stft, x


# ----------------------------------------------------------------------------
# Synthetic init + plain-JAX reference
# ----------------------------------------------------------------------------
def init_params(key):
    """Deterministic synthetic init (shapes match the PyTorch module)."""
    ks = jax.random.split(key, 10)

    def lin(k, fan_in, fan_out):
        bound = 1.0 / jnp.sqrt(fan_in)
        kw, kb = jax.random.split(k)
        w = jax.random.uniform(kw, (fan_in, fan_out), jnp.float32, -bound, bound)
        b = jax.random.uniform(kb, (1, fan_out), jnp.float32, -bound, bound)
        return w, b

    w1a, b1a = lin(ks[0], INP_LEN, NEURONS)
    w1b, b1b = lin(ks[1], NEURONS, FFT_FEAT_DIM)
    w2a, b2a = lin(ks[2], FFT_FEAT_DIM, NEURONS)
    w2b, b2b = lin(ks[3], NEURONS, FFT_FEAT_DIM)
    win = jnp.zeros((1, FFT_FEAT_DIM), jnp.float32)   # module inits it to zeros
    w5, b5 = lin(ks[4], FFT_FEAT_DIM, HOP_LENGTH)
    return (w1a, b1a, w1b, b1b, w2a, b2a, w2b, b2b, win, w5, b5)


def ra_model_reference(feat, params):
    """Plain-JAX reference mirroring the PyTorch forward, for verification."""
    (w1a, b1a, w1b, b1b, w2a, b2a, w2b, b2b, win, w5, b5) = params
    feat = feat.reshape(feat.shape[0], -1)
    h = _leaky_relu(feat @ w1a + b1a)
    x = _leaky_relu(h @ w1b + b1b)
    h2 = _leaky_relu(x @ w2a + b2a)
    x2 = _leaky_relu(h2 @ w2b + b2b)
    stft = x2 + x
    gated = jax.nn.sigmoid(win) * stft
    out = jnp.tanh(gated @ w5 + b5)
    return stft, out


if __name__ == "__main__":
    key = jax.random.PRNGKey(0)
    k_feat, k_param = jax.random.split(key)

    feat = jax.random.normal(k_feat, (BATCH, INP_LEN), jnp.float32)
    params = init_params(k_param)

    stft, x = ra_model_pallas(feat, params)
    jax.block_until_ready((stft, x))

    stft_ref, x_ref = ra_model_reference(feat, params)
    assert stft.shape == (BATCH, FFT_FEAT_DIM) and x.shape == (BATCH, HOP_LENGTH)
    assert jnp.allclose(stft, stft_ref, rtol=5e-2, atol=5e-2)
    assert jnp.allclose(x, x_ref, rtol=5e-2, atol=5e-2)

    print("KERNEL_OK")
</pallas_src>

<mosaic_0001>
module attributes {stable_mosaic.version = 11 : i64} {
  func.func @kernel(%arg0: i32, %arg1: memref<16x128xbf16, #tpu.memory_space<vmem>>, %arg2: memref<5x128x128xbf16, #tpu.memory_space<vmem>>, %arg3: memref<8x128xf32, #tpu.memory_space<vmem>>, %arg4: memref<16x128xf32, #tpu.memory_space<vmem>>) attributes {dimension_semantics = [#tpu.dimension_semantics<arbitrary>], iteration_bounds = array<i64: 1>, scalar_prefetch = 0 : i64, scratch_operands = 0 : i64, tpu.core_type = #tpu.core_type<tc>, window_params = [{transform_indices = @transform_0, window_bounds = array<i64: 16, 128>}, {pipeline_mode = #tpu.pipeline_mode<synchronous>, transform_indices = @transform_1, window_bounds = array<i64: 5, 128, 128>}, {pipeline_mode = #tpu.pipeline_mode<synchronous>, transform_indices = @transform_2, window_bounds = array<i64: 8, 128>}, {transform_indices = @transform_3, window_bounds = array<i64: 16, 128>}]} {
    %c0 = arith.constant 0 : index
    %c0_0 = arith.constant 0 : index
    %0 = vector.load %arg1[%c0, %c0_0] : memref<16x128xbf16, #tpu.memory_space<vmem>>, vector<16x128xbf16>
    %c0_1 = arith.constant 0 : index
    %c0_2 = arith.constant 0 : index
    %c0_3 = arith.constant 0 : index
    %1 = vector.load %arg2[%c0_1, %c0_2, %c0_3] : memref<5x128x128xbf16, #tpu.memory_space<vmem>>, vector<1x128x128xbf16>
    %2 = vector.shape_cast %1 : vector<1x128x128xbf16> to vector<128x128xbf16>
    %cst = arith.constant dense<0.000000e+00> : vector<16x128xf32>
    %3 = tpu.matmul %0, %2, %cst {dimension_numbers = #tpu.dot_dimension_numbers<[1], [0], [0], [1], [0, 0, 1, 1], [], []>} : vector<16x128xbf16>, vector<128x128xbf16>, vector<16x128xf32> -> vector<16x128xf32>
    %c0_4 = arith.constant 0 : index
    %c0_5 = arith.constant 0 : index
    %4 = vector.load %arg3[%c0_4, %c0_5] : memref<8x128xf32, #tpu.memory_space<vmem>>, vector<1x128xf32>
    %5 = vector.broadcast %4 : vector<1x128xf32> to vector<16x128xf32>
    %6 = arith.addf %3, %5 : vector<16x128xf32>
    %cst_6 = arith.constant 0.000000e+00 : f32
    %7 = vector.broadcast %cst_6 : f32 to vector<16x128xf32>
    %8 = arith.cmpf ogt, %6, %7 : vector<16x128xf32>
    %cst_7 = arith.constant 0.00999999977 : f32
    %9 = vector.broadcast %cst_7 : f32 to vector<16x128xf32>
    %10 = arith.mulf %9, %6 : vector<16x128xf32>
    %11 = arith.select %8, %6, %10 : vector<16x128xi1>, vector<16x128xf32>
    %12 = arith.truncf %11 : vector<16x128xf32> to vector<16x128xbf16>
    %c1 = arith.constant 1 : index
    %c0_8 = arith.constant 0 : index
    %c0_9 = arith.constant 0 : index
    %13 = vector.load %arg2[%c1, %c0_8, %c0_9] : memref<5x128x128xbf16, #tpu.memory_space<vmem>>, vector<1x128x128xbf16>
    %14 = vector.shape_cast %13 : vector<1x128x128xbf16> to vector<128x128xbf16>
    %cst_10 = arith.constant dense<0.000000e+00> : vector<16x128xf32>
    %15 = tpu.matmul %12, %14, %cst_10 {dimension_numbers = #tpu.dot_dimension_numbers<[1], [0], [0], [1], [0, 0, 1, 1], [], []>} : vector<16x128xbf16>, vector<128x128xbf16>, vector<16x128xf32> -> vector<16x128xf32>
    %c1_11 = arith.constant 1 : index
    %c0_12 = arith.constant 0 : index
    %16 = vector.load %arg3[%c1_11, %c0_12] : memref<8x128xf32, #tpu.memory_space<vmem>>, vector<1x128xf32>
    %17 = vector.broadcast %16 : vector<1x128xf32> to vector<16x128xf32>
    %18 = arith.addf %15, %17 : vector<16x128xf32>
    %cst_13 = arith.constant 0.000000e+00 : f32
    %19 = vector.broadcast %cst_13 : f32 to vector<16x128xf32>
    %20 = arith.cmpf ogt, %18, %19 : vector<16x128xf32>
    %cst_14 = arith.constant 0.00999999977 : f32
    %21 = vector.broadcast %cst_14 : f32 to vector<16x128xf32>
    %22 = arith.mulf %21, %18 : vector<16x128xf32>
    %23 = arith.select %20, %18, %22 : vector<16x128xi1>, vector<16x128xf32>
    %24 = arith.truncf %23 : vector<16x128xf32> to vector<16x128xbf16>
    %c2 = arith.constant 2 : index
    %c0_15 = arith.constant 0 : index
    %c0_16 = arith.constant 0 : index
    %25 = vector.load %arg2[%c2, %c0_15, %c0_16] : memref<5x128x128xbf16, #tpu.memory_space<vmem>>, vector<1x128x128xbf16>
    %26 = vector.shape_cast %25 : vector<1x128x128xbf16> to vector<128x128xbf16>
    %cst_17 = arith.constant dense<0.000000e+00> : vector<16x128xf32>
    %27 = tpu.matmul %24, %26, %cst_17 {dimension_numbers = #tpu.dot_dimension_numbers<[1], [0], [0], [1], [0, 0, 1, 1], [], []>} : vector<16x128xbf16>, vector<128x128xbf16>, vector<16x128xf32> -> vector<16x128xf32>
    %c2_18 = arith.constant 2 : index
    %c0_19 = arith.constant 0 : index
    %28 = vector.load %arg3[%c2_18, %c0_19] : memref<8x128xf32, #tpu.memory_space<vmem>>, vector<1x128xf32>
    %29 = vector.broadcast %28 : vector<1x128xf32> to vector<16x128xf32>
    %30 = arith.addf %27, %29 : vector<16x128xf32>
    %cst_20 = arith.constant 0.000000e+00 : f32
    %31 = vector.broadcast %cst_20 : f32 to vector<16x128xf32>
    %32 = arith.cmpf ogt, %30, %31 : vector<16x128xf32>
    %cst_21 = arith.constant 0.00999999977 : f32
    %33 = vector.broadcast %cst_21 : f32 to vector<16x128xf32>
    %34 = arith.mulf %33, %30 : vector<16x128xf32>
    %35 = arith.select %32, %30, %34 : vector<16x128xi1>, vector<16x128xf32>
    %36 = arith.truncf %35 : vector<16x128xf32> to vector<16x128xbf16>
    %c3 = arith.constant 3 : index
    %c0_22 = arith.constant 0 : index
    %c0_23 = arith.constant 0 : index
    %37 = vector.load %arg2[%c3, %c0_22, %c0_23] : memref<5x128x128xbf16, #tpu.memory_space<vmem>>, vector<1x128x128xbf16>
    %38 = vector.shape_cast %37 : vector<1x128x128xbf16> to vector<128x128xbf16>
    %cst_24 = arith.constant dense<0.000000e+00> : vector<16x128xf32>
    %39 = tpu.matmul %36, %38, %cst_24 {dimension_numbers = #tpu.dot_dimension_numbers<[1], [0], [0], [1], [0, 0, 1, 1], [], []>} : vector<16x128xbf16>, vector<128x128xbf16>, vector<16x128xf32> -> vector<16x128xf32>
    %c3_25 = arith.constant 3 : index
    %c0_26 = arith.constant 0 : index
    %40 = vector.load %arg3[%c3_25, %c0_26] : memref<8x128xf32, #tpu.memory_space<vmem>>, vector<1x128xf32>
    %41 = vector.broadcast %40 : vector<1x128xf32> to vector<16x128xf32>
    %42 = arith.addf %39, %41 : vector<16x128xf32>
    %cst_27 = arith.constant 0.000000e+00 : f32
    %43 = vector.broadcast %cst_27 : f32 to vector<16x128xf32>
    %44 = arith.cmpf ogt, %42, %43 : vector<16x128xf32>
    %cst_28 = arith.constant 0.00999999977 : f32
    %45 = vector.broadcast %cst_28 : f32 to vector<16x128xf32>
    %46 = arith.mulf %45, %42 : vector<16x128xf32>
    %47 = arith.select %44, %42, %46 : vector<16x128xi1>, vector<16x128xf32>
    %48 = arith.addf %47, %23 : vector<16x128xf32>
    %49 = arith.truncf %48 : vector<16x128xf32> to vector<16x128xbf16>
    %c4 = arith.constant 4 : index
    %c0_29 = arith.constant 0 : index
    %c0_30 = arith.constant 0 : index
    %50 = vector.load %arg2[%c4, %c0_29, %c0_30] : memref<5x128x128xbf16, #tpu.memory_space<vmem>>, vector<1x128x128xbf16>
    %51 = vector.shape_cast %50 : vector<1x128x128xbf16> to vector<128x128xbf16>
    %cst_31 = arith.constant dense<0.000000e+00> : vector<16x128xf32>
    %52 = tpu.matmul %49, %51, %cst_31 {dimension_numbers = #tpu.dot_dimension_numbers<[1], [0], [0], [1], [0, 0, 1, 1], [], []>} : vector<16x128xbf16>, vector<128x128xbf16>, vector<16x128xf32> -> vector<16x128xf32>
    %c4_32 = arith.constant 4 : index
    %c0_33 = arith.constant 0 : index
    %53 = vector.load %arg3[%c4_32, %c0_33] : memref<8x128xf32, #tpu.memory_space<vmem>>, vector<1x128xf32>
    %54 = vector.broadcast %53 : vector<1x128xf32> to vector<16x128xf32>
    %55 = arith.addf %52, %54 : vector<16x128xf32>
    %56 = math.tanh %55 : vector<16x128xf32>
    %57 = arith.addf %48, %56 : vector<16x128xf32>
    %c0_34 = arith.constant 0 : index
    %c0_35 = arith.constant 0 : index
    %58 = vector.load %arg4[%c0_34, %c0_35] : memref<16x128xf32, #tpu.memory_space<vmem>>, vector<16x128xf32>
    tpu.vector_store %arg4[%c0_34, %c0_35], %57 {strides = array<i32>} : memref<16x128xf32, #tpu.memory_space<vmem>>, vector<16x128xf32>,
    return
  }
  func.func @transform_0(%arg0: i32) -> (i32, i32) {
    %c0_i32 = arith.constant 0 : i32
    %c0_i32_0 = arith.constant 0 : i32
    return %arg0, %c0_i32 : i32, i32
  }
  func.func @transform_1(%arg0: i32) -> (i32, i32, i32) {
    %c0_i32 = arith.constant 0 : i32
    %c0_i32_0 = arith.constant 0 : i32
    %c0_i32_1 = arith.constant 0 : i32
    %c0_i32_2 = arith.constant 0 : i32
    return %c0_i32, %c0_i32_0, %c0_i32_1 : i32, i32, i32
  }
  func.func @transform_2(%arg0: i32) -> (i32, i32) {
    %c0_i32 = arith.constant 0 : i32
    %c0_i32_0 = arith.constant 0 : i32
    %c0_i32_1 = arith.constant 0 : i32
    return %c0_i32, %c0_i32_0 : i32, i32
  }
  func.func @transform_3(%arg0: i32) -> (i32, i32) {
    %c0_i32 = arith.constant 0 : i32
    %c0_i32_0 = arith.constant 0 : i32
    return %arg0, %c0_i32 : i32, i32
  }
}

</mosaic_0001>

<llo_original>
// kernel: tpu_custom_call.1
$region0: #{tpu_custom_call.1}
  #allocation0 [shape = 'u32[]', space=smem, size = 0x4, offset = 0x4, fixed_abs, tag = 'smem constant byte address 0x4 - core index']
  #allocation1 [shape = 'u32[144,128]{1,0:T(1,128)}', space=vmem, size = 0x12000, scoped, tag = 'internal scratch']
  %s0 = inlined_call_operand.hbm [shape: bf16[16,128], index: 0, kind: input, shape index: {}]
  %s1 = inlined_call_operand.hbm [shape: bf16[5,128,128], index: 1, kind: input, shape index: {}]
  %s2 = inlined_call_operand.hbm [shape: f32[8,128], index: 2, kind: input, shape index: {}]
  %s3 = inlined_call_operand.hbm [shape: f32[16,128], index: 3, kind: output, shape index: {}]
  %s4 = sld [smem:[#allocation0]]
  $region34: #{tpu_custom_call.1} parent=0
    _
  %s6 = ssub.s32 1, %s4
  %s7 = scalar_select 0, %s6, %s4
  $region1: #{tpu_custom_call.1} parent=0
    #allocation2 [shape = 'u8[4096]{0}', space=vmem, size = 0x1000, scoped, tag = 'input window, operand 0, single buffered']
    #allocation3 [shape = 's32[1]{0}', space=sflag, size = 0x4, scoped, tag = 'scoped memory for tpu_custom_call.1']
    #allocation4 [shape = 's32[1]{0}', space=sflag, size = 0x4, scoped, tag = 'scoped memory for tpu_custom_call.1']
    #allocation5 [shape = 'u8[163840]{0}', space=vmem, size = 0x28000, scoped, tag = 'input window, operand 1, single buffered']
    #allocation6 [shape = 's32[1]{0}', space=sflag, size = 0x4, scoped, tag = 'scoped memory for tpu_custom_call.1']
    #allocation7 [shape = 'u8[4096]{0}', space=vmem, size = 0x1000, scoped, tag = 'input window, operand 2, single buffered']
    #allocation8 [shape = 'u8[8192]{0}', space=vmem, size = 0x2000, scoped, tag = 'output window, operand 0, single buffered']
    %8 = vsyncpa [#allocation3], 0
    %9 = vsyncpa [#allocation6], 0
    %10 = vsyncpa [#allocation4], 0
    // Predicated region
    $region2: #{tpu_custom_call.1} parent=1 // pred_check
      _
    $region3: #{tpu_custom_call.1} parent=1 // pred_check_branch
      %12 = sbr.rel (0) target = $region5
    $region4: #{tpu_custom_call.1} parent=1 // pred_region
      %s14 = ssub.s32 128, 128
      %15 = vsyncadd [#allocation3], %s14
      %s16 = sshll.u32 [#allocation2], 4
      %s17 = int_to_ptr.vmem [resolvable:$true] %s16
      %22 = dma.hbm_to_vmem [thread:$0]  %s0, 128, %s17, [#allocation3], 64, 64, 4
    $region5: #{tpu_custom_call.1} parent=1 // pred_fallthru
      _
    // Predicated region
    $region6: #{tpu_custom_call.1} parent=1 // pred_check
      _
    $region7: #{tpu_custom_call.1} parent=1 // pred_check_branch
      %24 = sbr.rel (0) target = $region9
    $region8: #{tpu_custom_call.1} parent=1 // pred_region
      %s26 = ssub.s32 5120, 5120
      %27 = vsyncadd [#allocation6], %s26
      %s28 = sshll.u32 [#allocation5], 4
      %s29 = int_to_ptr.vmem [resolvable:$true] %s28
      %34 = dma.hbm_to_vmem [thread:$0]  %s1, 5120, %s29, [#allocation6], 64, 64, 4
    $region9: #{tpu_custom_call.1} parent=1 // pred_fallthru
      _
    // Predicated region
    $region10: #{tpu_custom_call.1} parent=1 // pred_check
      _
    $region11: #{tpu_custom_call.1} parent=1 // pred_check_branch
      %36 = sbr.rel (0) target = $region13
    $region12: #{tpu_custom_call.1} parent=1 // pred_region
      %s38 = ssub.s32 128, 128
      %39 = vsyncadd [#allocation6], %s38
      %s41 = sshll.u32 [#allocation7], 4
      %s42 = int_to_ptr.vmem [resolvable:$true] %s41
      %44 = dma.hbm_to_vmem [thread:$0]  %s2, 128, %s42, [#allocation6]
    $region13: #{tpu_custom_call.1} parent=1 // pred_fallthru
      _
    // Predicated region
    $region14: #{tpu_custom_call.1} parent=1 // pred_check
      _
    $region15: #{tpu_custom_call.1} parent=1 // pred_check_branch
      %46 = sbr.rel (0) target = $region17
    $region16: #{tpu_custom_call.1} parent=1 // pred_region
      %47 = dma.done [#allocation3], 128
    $region17: #{tpu_custom_call.1} parent=1 // pred_fallthru
      _
    // Predicated region
    $region18: #{tpu_custom_call.1} parent=1 // pred_check
      _
    $region19: #{tpu_custom_call.1} parent=1 // pred_check_branch
      %49 = sbr.rel (0) target = $region21
    $region20: #{tpu_custom_call.1} parent=1 // pred_region
      %50 = dma.done [#allocation6], 5120
    $region21: #{tpu_custom_call.1} parent=1 // pred_fallthru
      _
    // Predicated region
    $region22: #{tpu_custom_call.1} parent=1 // pred_check
      _
    $region23: #{tpu_custom_call.1} parent=1 // pred_check_branch
      %52 = sbr.rel (0) target = $region25
    $region24: #{tpu_custom_call.1} parent=1 // pred_region
      %53 = dma.done [#allocation6], 128
    $region25: #{tpu_custom_call.1} parent=1 // pred_fallthru
      _
    %v55 = vld [vmem:[#allocation2] sm:$0xf]
    %v56 = vld [vmem:[#allocation2 + $0x4] sm:$0xf]
    %v57 = vld [vmem:[#allocation5] sm:$0xf]
    %v58 = vld [vmem:[#allocation5 + $0x4] sm:$0xf]
    %v59 = vld [vmem:[#allocation5 + $0x8] sm:$0xf]
    %v60 = vld [vmem:[#allocation5 + $0xc] sm:$0xf]
    %v61 = vld [vmem:[#allocation5 + $0x10] sm:$0xf]
    %v62 = vld [vmem:[#allocation5 + $0x14] sm:$0xf]
    %v63 = vld [vmem:[#allocation5 + $0x18] sm:$0xf]
    %v64 = vld [vmem:[#allocation5 + $0x1c] sm:$0xf]
    %v65 = vld [vmem:[#allocation5 + $0x20] sm:$0xf]
    %v66 = vld [vmem:[#allocation5 + $0x24] sm:$0xf]
    %v67 = vld [vmem:[#allocation5 + $0x28] sm:$0xf]
    %v68 = vld [vmem:[#allocation5 + $0x2c] sm:$0xf]
    %v69 = vld [vmem:[#allocation5 + $0x30] sm:$0xf]
    %v70 = vld [vmem:[#allocation5 + $0x34] sm:$0xf]
    %v71 = vld [vmem:[#allocation5 + $0x38] sm:$0xf]
    %v72 = vld [vmem:[#allocation5 + $0x3c] sm:$0xf]
    %v73 = vld [vmem:[#allocation7] sm:$0x1]
    %v74 = vlaneseq
    %v75 = vshrl.u32 %v74, 7
    %v76 = vsub.s32 0, %v75
    %v77 = vrot.slane %v73, %v76
    %v80 = vunpack.c.l.b16 %v55
    %v81 = vunpack.c.l.b16 %v56
    %v82 = vpack.c.b16 %v81, %v80
    %v100 = vunpack.c.l.b16 %v57
    %v101 = vunpack.c.l.b16 %v58
    %v102 = vunpack.c.l.b16 %v59
    %v103 = vunpack.c.l.b16 %v60
    %v104 = vunpack.c.l.b16 %v61
    %v105 = vunpack.c.l.b16 %v62
    %v106 = vunpack.c.l.b16 %v63
    %v107 = vunpack.c.l.b16 %v64
    %v108 = vunpack.c.l.b16 %v65
    %v109 = vunpack.c.l.b16 %v66
    %v110 = vunpack.c.l.b16 %v67
    %v111 = vunpack.c.l.b16 %v68
    %v112 = vunpack.c.l.b16 %v69
    %v113 = vunpack.c.l.b16 %v70
    %v114 = vunpack.c.l.b16 %v71
    %v115 = vunpack.c.l.b16 %v72
    %v116 = vpack.c.b16 %v101, %v100
    %v117 = vpack.c.b16 %v103, %v102
    %v118 = vpack.c.b16 %v105, %v104
    %v119 = vpack.c.b16 %v107, %v106
    %v120 = vpack.c.b16 %v109, %v108
    %v121 = vpack.c.b16 %v111, %v110
    %v122 = vpack.c.b16 %v113, %v112
    %v123 = vpack.c.b16 %v115, %v114
    %132 = vmatprep.subr.bf16.mxu0 0
    %133 = vmatpush1.bf16.msra.mxu0 %v123
    %134 = vmatprep.subr.bf16.mxu0 0
    %135 = vmatpush1.bf16.msra.mxu0 %v122
    %136 = vmatprep.subr.bf16.mxu0 0
    %137 = vmatpush1.bf16.msra.mxu0 %v121
    %138 = vmatprep.subr.bf16.mxu0 0
    %139 = vmatpush1.bf16.msra.mxu0 %v120
    %140 = vmatprep.subr.bf16.mxu0 0
    %141 = vmatpush1.bf16.msra.mxu0 %v119
    %142 = vmatprep.subr.bf16.mxu0 0
    %143 = vmatpush1.bf16.msra.mxu0 %v118
    %144 = vmatprep.subr.bf16.mxu0 0
    %145 = vmatpush1.bf16.msra.mxu0 %v117
    %146 = vmatprep.subr.bf16.mxu0 0
    %147 = vmatpush1.bf16.msra.mxu0 %v116
    %148 = vmatprep.subr.bf16.mxu0 0
    %149 = vmatpush2.bf16.msra.mxu0 0
    %150 = vmatprep.subr.bf16.mxu0 0
    %151 = vmatpush2.bf16.msra.mxu0 0
    %152 = vmatprep.subr.bf16.mxu0 0
    %153 = vmatpush2.bf16.msra.mxu0 0
    %154 = vmatprep.subr.bf16.mxu0 0
    %155 = vmatpush2.bf16.msra.mxu0 0
    %156 = vmatprep.subr.bf16.mxu0 0
    %157 = vmatpush2.bf16.msra.mxu0 0
    %158 = vmatprep.subr.bf16.mxu0 0
    %159 = vmatpush2.bf16.msra.mxu0 0
    %160 = vmatprep.subr.bf16.mxu0 0
    %161 = vmatpush2.bf16.msra.mxu0 0
    %162 = vmatprep.subr.bf16.mxu0 0
    %163 = vmatpush2.bf16.msra.mxu0 0
    %164 = vmatprep.mubr.bf16.mxu0 0
    %165 = vmatmul.mubr.bf16.gmra.mxu0 %v82
    %v166 = vpop.f32.mrf.mxu0
    %v167 = vadd.f32 %v77, %v166
    %v168 = vpop.f32.mrf.mxu0
    %v169 = vpop.f32.mrf.mxu0
    %v170 = vadd.f32 %v77, %v169
    %v171 = vpop.f32.mrf.mxu0
    %172 = vdwg.mxu0
    %vm173 = vcmp.gt.f32.partialorder %v167, 0.0
    %vm174 = vcmp.gt.f32.partialorder %v170, 0.0
    %v175 = vmul.f32 %v167, 0.01
    %v176 = vmul.f32 %v170, 0.01
    %v177 = vsel %vm173, %v167, %v175
    %v178 = vsel %vm174, %v170, %v176
    %v179 = vpack.c.bf16 %v178, %v177
    %s180 = scalar_lea.vmem [#allocation5], 64
    %v181 = vld [vmem:[%s180] sm:$0xf]
    %v182 = vld [vmem:[%s180 + $0x4] sm:$0xf]
    %v183 = vld [vmem:[%s180 + $0x8] sm:$0xf]
    %v184 = vld [vmem:[%s180 + $0xc] sm:$0xf]
    %v185 = vld [vmem:[%s180 + $0x10] sm:$0xf]
    %v186 = vld [vmem:[%s180 + $0x14] sm:$0xf]
    %v187 = vld [vmem:[%s180 + $0x18] sm:$0xf]
    %v188 = vld [vmem:[%s180 + $0x1c] sm:$0xf]
    %v189 = vld [vmem:[%s180 + $0x20] sm:$0xf]
    %v190 = vld [vmem:[%s180 + $0x24] sm:$0xf]
    %v191 = vld [vmem:[%s180 + $0x28] sm:$0xf]
    %v192 = vld [vmem:[%s180 + $0x2c] sm:$0xf]
    %v193 = vld [vmem:[%s180 + $0x30] sm:$0xf]
    %v194 = vld [vmem:[%s180 + $0x34] sm:$0xf]
    %v195 = vld [vmem:[%s180 + $0x38] sm:$0xf]
    %v196 = vld [vmem:[%s180 + $0x3c] sm:$0xf]
    %v197 = vld [vmem:[#allocation7 + $0x1] sm:$0x1]
    %v198 = vlaneseq
    %v199 = vshrl.u32 %v198, 7
    %v200 = vsub.s32 0, %v199
    %v201 = vrot.slane %v197, %v200
    %v218 = vunpack.c.l.b16 %v181
    %v219 = vunpack.c.l.b16 %v182
    %v220 = vunpack.c.l.b16 %v183
    %v221 = vunpack.c.l.b16 %v184
    %v222 = vunpack.c.l.b16 %v185
    %v223 = vunpack.c.l.b16 %v186
    %v224 = vunpack.c.l.b16 %v187
    %v225 = vunpack.c.l.b16 %v188
    %v226 = vunpack.c.l.b16 %v189
    %v227 = vunpack.c.l.b16 %v190
    %v228 = vunpack.c.l.b16 %v191
    %v229 = vunpack.c.l.b16 %v192
    %v230 = vunpack.c.l.b16 %v193
    %v231 = vunpack.c.l.b16 %v194
    %v232 = vunpack.c.l.b16 %v195
    %v233 = vunpack.c.l.b16 %v196
    %v234 = vpack.c.b16 %v219, %v218
    %v235 = vpack.c.b16 %v221, %v220
    %v236 = vpack.c.b16 %v223, %v222
    %v237 = vpack.c.b16 %v225, %v224
    %v238 = vpack.c.b16 %v227, %v226
    %v239 = vpack.c.b16 %v229, %v228
    %v240 = vpack.c.b16 %v231, %v230
    %v241 = vpack.c.b16 %v233, %v232
    %250 = vmatprep.subr.bf16.mxu0 0
    %251 = vmatpush1.bf16.msra.mxu0 %v241
    %252 = vmatprep.subr.bf16.mxu0 0
    %253 = vmatpush1.bf16.msra.mxu0 %v240
    %254 = vmatprep.subr.bf16.mxu0 0
    %255 = vmatpush1.bf16.msra.mxu0 %v239
    %256 = vmatprep.subr.bf16.mxu0 0
    %257 = vmatpush1.bf16.msra.mxu0 %v238
    %258 = vmatprep.subr.bf16.mxu0 0
    %259 = vmatpush1.bf16.msra.mxu0 %v237
    %260 = vmatprep.subr.bf16.mxu0 0
    %261 = vmatpush1.bf16.msra.mxu0 %v236
    %262 = vmatprep.subr.bf16.mxu0 0
    %263 = vmatpush1.bf16.msra.mxu0 %v235
    %264 = vmatprep.subr.bf16.mxu0 0
    %265 = vmatpush1.bf16.msra.mxu0 %v234
    %266 = vmatprep.subr.bf16.mxu0 0
    %267 = vmatpush2.bf16.msra.mxu0 0
    %268 = vmatprep.subr.bf16.mxu0 0
    %269 = vmatpush2.bf16.msra.mxu0 0
    %270 = vmatprep.subr.bf16.mxu0 0
    %271 = vmatpush2.bf16.msra.mxu0 0
    %272 = vmatprep.subr.bf16.mxu0 0
    %273 = vmatpush2.bf16.msra.mxu0 0
    %274 = vmatprep.subr.bf16.mxu0 0
    %275 = vmatpush2.bf16.msra.mxu0 0
    %276 = vmatprep.subr.bf16.mxu0 0
    %277 = vmatpush2.bf16.msra.mxu0 0
    %278 = vmatprep.subr.bf16.mxu0 0
    %279 = vmatpush2.bf16.msra.mxu0 0
    %280 = vmatprep.subr.bf16.mxu0 0
    %281 = vmatpush2.bf16.msra.mxu0 0
    %282 = vmatprep.mubr.bf16.mxu0 0
    %283 = vmatmul.mubr.bf16.gmra.mxu0 %v179
    %v284 = vpop.f32.mrf.mxu0
    %v285 = vadd.f32 %v201, %v284
    %v286 = vpop.f32.mrf.mxu0
    %v287 = vpop.f32.mrf.mxu0
    %v288 = vadd.f32 %v201, %v287
    %v289 = vpop.f32.mrf.mxu0
    %290 = vdwg.mxu0
    %vm291 = vcmp.gt.f32.partialorder %v285, 0.0
    %vm292 = vcmp.gt.f32.partialorder %v288, 0.0
    %v293 = vmul.f32 %v285, 0.01
    %v294 = vmul.f32 %v288, 0.01
    %v295 = vsel %vm291, %v285, %v293
    %v296 = vsel %vm292, %v288, %v294
    %v297 = vpack.c.bf16 %v296, %v295
    %s298 = scalar_lea.vmem [#allocation5], 128
    %v299 = vld [vmem:[%s298] sm:$0xf]
    %v300 = vld [vmem:[%s298 + $0x4] sm:$0xf]
    %v301 = vld [vmem:[%s298 + $0x8] sm:$0xf]
    %v302 = vld [vmem:[%s298 + $0xc] sm:$0xf]
    %v303 = vld [vmem:[%s298 + $0x10] sm:$0xf]
    %v304 = vld [vmem:[%s298 + $0x14] sm:$0xf]
    %v305 = vld [vmem:[%s298 + $0x18] sm:$0xf]
    %v306 = vld [vmem:[%s298 + $0x1c] sm:$0xf]
    %v307 = vld [vmem:[%s298 + $0x20] sm:$0xf]
    %v308 = vld [vmem:[%s298 + $0x24] sm:$0xf]
    %v309 = vld [vmem:[%s298 + $0x28] sm:$0xf]
    %v310 = vld [vmem:[%s298 + $0x2c] sm:$0xf]
    %v311 = vld [vmem:[%s298 + $0x30] sm:$0xf]
    %v312 = vld [vmem:[%s298 + $0x34] sm:$0xf]
    %v313 = vld [vmem:[%s298 + $0x38] sm:$0xf]
    %v314 = vld [vmem:[%s298 + $0x3c] sm:$0xf]
    %v315 = vld [vmem:[#allocation7 + $0x2] sm:$0x1]
    %v316 = vlaneseq
    %v317 = vshrl.u32 %v316, 7
    %v318 = vsub.s32 0, %v317
    %v319 = vrot.slane %v315, %v318
    %v336 = vunpack.c.l.b16 %v299
    %v337 = vunpack.c.l.b16 %v300
    %v338 = vunpack.c.l.b16 %v301
    %v339 = vunpack.c.l.b16 %v302
    %v340 = vunpack.c.l.b16 %v303
    %v341 = vunpack.c.l.b16 %v304
    %v342 = vunpack.c.l.b16 %v305
    %v343 = vunpack.c.l.b16 %v306
    %v344 = vunpack.c.l.b16 %v307
    %v345 = vunpack.c.l.b16 %v308
    %v346 = vunpack.c.l.b16 %v309
    %v347 = vunpack.c.l.b16 %v310
    %v348 = vunpack.c.l.b16 %v311
    %v349 = vunpack.c.l.b16 %v312
    %v350 = vunpack.c.l.b16 %v313
    %v351 = vunpack.c.l.b16 %v314
    %v352 = vpack.c.b16 %v337, %v336
    %v353 = vpack.c.b16 %v339, %v338
    %v354 = vpack.c.b16 %v341, %v340
    %v355 = vpack.c.b16 %v343, %v342
    %v356 = vpack.c.b16 %v345, %v344
    %v357 = vpack.c.b16 %v347, %v346
    %v358 = vpack.c.b16 %v349, %v348
    %v359 = vpack.c.b16 %v351, %v350
    %368 = vmatprep.subr.bf16.mxu0 0
    %369 = vmatpush1.bf16.msra.mxu0 %v359
    %370 = vmatprep.subr.bf16.mxu0 0
    %371 = vmatpush1.bf16.msra.mxu0 %v358
    %372 = vmatprep.subr.bf16.mxu0 0
    %373 = vmatpush1.bf16.msra.mxu0 %v357
    %374 = vmatprep.subr.bf16.mxu0 0
    %375 = vmatpush1.bf16.msra.mxu0 %v356
    %376 = vmatprep.subr.bf16.mxu0 0
    %377 = vmatpush1.bf16.msra.mxu0 %v355
    %378 = vmatprep.subr.bf16.mxu0 0
    %379 = vmatpush1.bf16.msra.mxu0 %v354
    %380 = vmatprep.subr.bf16.mxu0 0
    %381 = vmatpush1.bf16.msra.mxu0 %v353
    %382 = vmatprep.subr.bf16.mxu0 0
    %383 = vmatpush1.bf16.msra.mxu0 %v352
    %384 = vmatprep.subr.bf16.mxu0 0
    %385 = vmatpush2.bf16.msra.mxu0 0
    %386 = vmatprep.subr.bf16.mxu0 0
    %387 = vmatpush2.bf16.msra.mxu0 0
    %388 = vmatprep.subr.bf16.mxu0 0
    %389 = vmatpush2.bf16.msra.mxu0 0
    %390 = vmatprep.subr.bf16.mxu0 0
    %391 = vmatpush2.bf16.msra.mxu0 0
    %392 = vmatprep.subr.bf16.mxu0 0
    %393 = vmatpush2.bf16.msra.mxu0 0
    %394 = vmatprep.subr.bf16.mxu0 0
    %395 = vmatpush2.bf16.msra.mxu0 0
    %396 = vmatprep.subr.bf16.mxu0 0
    %397 = vmatpush2.bf16.msra.mxu0 0
    %398 = vmatprep.subr.bf16.mxu0 0
    %399 = vmatpush2.bf16.msra.mxu0 0
    %400 = vmatprep.mubr.bf16.mxu0 0
    %401 = vmatmul.mubr.bf16.gmra.mxu0 %v297
    %v402 = vpop.f32.mrf.mxu0
    %v403 = vadd.f32 %v319, %v402
    %v404 = vpop.f32.mrf.mxu0
    %v405 = vpop.f32.mrf.mxu0
    %v406 = vadd.f32 %v319, %v405
    %v407 = vpop.f32.mrf.mxu0
    %408 = vdwg.mxu0
    %vm409 = vcmp.gt.f32.partialorder %v403, 0.0
    %vm410 = vcmp.gt.f32.partialorder %v406, 0.0
    %v411 = vmul.f32 %v403, 0.01
    %v412 = vmul.f32 %v406, 0.01
    %v413 = vsel %vm409, %v403, %v411
    %v414 = vsel %vm410, %v406, %v412
    %v415 = vpack.c.bf16 %v414, %v413
    %s416 = scalar_lea.vmem [#allocation5], 192
    %v417 = vld [vmem:[%s416] sm:$0xf]
    %v418 = vld [vmem:[%s416 + $0x4] sm:$0xf]
    %v419 = vld [vmem:[%s416 + $0x8] sm:$0xf]
    %v420 = vld [vmem:[%s416 + $0xc] sm:$0xf]
    %v421 = vld [vmem:[%s416 + $0x10] sm:$0xf]
    %v422 = vld [vmem:[%s416 + $0x14] sm:$0xf]
    %v423 = vld [vmem:[%s416 + $0x18] sm:$0xf]
    %v424 = vld [vmem:[%s416 + $0x1c] sm:$0xf]
    %v425 = vld [vmem:[%s416 + $0x20] sm:$0xf]
    %v426 = vld [vmem:[%s416 + $0x24] sm:$0xf]
    %v427 = vld [vmem:[%s416 + $0x28] sm:$0xf]
    %v428 = vld [vmem:[%s416 + $0x2c] sm:$0xf]
    %v429 = vld [vmem:[%s416 + $0x30] sm:$0xf]
    %v430 = vld [vmem:[%s416 + $0x34] sm:$0xf]
    %v431 = vld [vmem:[%s416 + $0x38] sm:$0xf]
    %v432 = vld [vmem:[%s416 + $0x3c] sm:$0xf]
    %v433 = vld [vmem:[#allocation7 + $0x3] sm:$0x1]
    %v434 = vlaneseq
    %v435 = vshrl.u32 %v434, 7
    %v436 = vsub.s32 0, %v435
    %v437 = vrot.slane %v433, %v436
    %v454 = vunpack.c.l.b16 %v417
    %v455 = vunpack.c.l.b16 %v418
    %v456 = vunpack.c.l.b16 %v419
    %v457 = vunpack.c.l.b16 %v420
    %v458 = vunpack.c.l.b16 %v421
    %v459 = vunpack.c.l.b16 %v422
    %v460 = vunpack.c.l.b16 %v423
    %v461 = vunpack.c.l.b16 %v424
    %v462 = vunpack.c.l.b16 %v425
    %v463 = vunpack.c.l.b16 %v426
    %v464 = vunpack.c.l.b16 %v427
    %v465 = vunpack.c.l.b16 %v428
    %v466 = vunpack.c.l.b16 %v429
    %v467 = vunpack.c.l.b16 %v430
    %v468 = vunpack.c.l.b16 %v431
    %v469 = vunpack.c.l.b16 %v432
    %v470 = vpack.c.b16 %v455, %v454
    %v471 = vpack.c.b16 %v457, %v456
    %v472 = vpack.c.b16 %v459, %v458
    %v473 = vpack.c.b16 %v461, %v460
    %v474 = vpack.c.b16 %v463, %v462
    %v475 = vpack.c.b16 %v465, %v464
    %v476 = vpack.c.b16 %v467, %v466
    %v477 = vpack.c.b16 %v469, %v468
    %486 = vmatprep.subr.bf16.mxu0 0
    %487 = vmatpush1.bf16.msra.mxu0 %v477
    %488 = vmatprep.subr.bf16.mxu0 0
    %489 = vmatpush1.bf16.msra.mxu0 %v476
    %490 = vmatprep.subr.bf16.mxu0 0
    %491 = vmatpush1.bf16.msra.mxu0 %v475
    %492 = vmatprep.subr.bf16.mxu0 0
    %493 = vmatpush1.bf16.msra.mxu0 %v474
    %494 = vmatprep.subr.bf16.mxu0 0
    %495 = vmatpush1.bf16.msra.mxu0 %v473
    %496 = vmatprep.subr.bf16.mxu0 0
    %497 = vmatpush1.bf16.msra.mxu0 %v472
    %498 = vmatprep.subr.bf16.mxu0 0
    %499 = vmatpush1.bf16.msra.mxu0 %v471
    %500 = vmatprep.subr.bf16.mxu0 0
    %501 = vmatpush1.bf16.msra.mxu0 %v470
    %502 = vmatprep.subr.bf16.mxu0 0
    %503 = vmatpush2.bf16.msra.mxu0 0
    %504 = vmatprep.subr.bf16.mxu0 0
    %505 = vmatpush2.bf16.msra.mxu0 0
    %506 = vmatprep.subr.bf16.mxu0 0
    %507 = vmatpush2.bf16.msra.mxu0 0
    %508 = vmatprep.subr.bf16.mxu0 0
    %509 = vmatpush2.bf16.msra.mxu0 0
    %510 = vmatprep.subr.bf16.mxu0 0
    %511 = vmatpush2.bf16.msra.mxu0 0
    %512 = vmatprep.subr.bf16.mxu0 0
    %513 = vmatpush2.bf16.msra.mxu0 0
    %514 = vmatprep.subr.bf16.mxu0 0
    %515 = vmatpush2.bf16.msra.mxu0 0
    %516 = vmatprep.subr.bf16.mxu0 0
    %517 = vmatpush2.bf16.msra.mxu0 0
    %518 = vmatprep.mubr.bf16.mxu0 0
    %519 = vmatmul.mubr.bf16.gmra.mxu0 %v415
    %v520 = vpop.f32.mrf.mxu0
    %v521 = vadd.f32 %v437, %v520
    %v522 = vpop.f32.mrf.mxu0
    %v523 = vpop.f32.mrf.mxu0
    %v524 = vadd.f32 %v437, %v523
    %v525 = vpop.f32.mrf.mxu0
    %526 = vdwg.mxu0
    %vm527 = vcmp.gt.f32.partialorder %v521, 0.0
    %vm528 = vcmp.gt.f32.partialorder %v524, 0.0
    %v529 = vmul.f32 %v521, 0.01
    %v530 = vmul.f32 %v524, 0.01
    %v531 = vsel %vm527, %v521, %v529
    %v532 = vsel %vm528, %v524, %v530
    %v533 = vadd.f32 %v531, %v295
    %v534 = vadd.f32 %v532, %v296
    %v535 = vpack.c.bf16 %v534, %v533
    %s536 = scalar_lea.vmem [#allocation5], 256
    %v537 = vld [vmem:[%s536] sm:$0xf]
    %v538 = vld [vmem:[%s536 + $0x4] sm:$0xf]
    %v539 = vld [vmem:[%s536 + $0x8] sm:$0xf]
    %v540 = vld [vmem:[%s536 + $0xc] sm:$0xf]
    %v541 = vld [vmem:[%s536 + $0x10] sm:$0xf]
    %v542 = vld [vmem:[%s536 + $0x14] sm:$0xf]
    %v543 = vld [vmem:[%s536 + $0x18] sm:$0xf]
    %v544 = vld [vmem:[%s536 + $0x1c] sm:$0xf]
    %v545 = vld [vmem:[%s536 + $0x20] sm:$0xf]
    %v546 = vld [vmem:[%s536 + $0x24] sm:$0xf]
    %v547 = vld [vmem:[%s536 + $0x28] sm:$0xf]
    %v548 = vld [vmem:[%s536 + $0x2c] sm:$0xf]
    %v549 = vld [vmem:[%s536 + $0x30] sm:$0xf]
    %v550 = vld [vmem:[%s536 + $0x34] sm:$0xf]
    %v551 = vld [vmem:[%s536 + $0x38] sm:$0xf]
    %v552 = vld [vmem:[%s536 + $0x3c] sm:$0xf]
    %v553 = vld [vmem:[#allocation7 + $0x4] sm:$0x1]
    %v554 = vlaneseq
    %v555 = vshrl.u32 %v554, 7
    %v556 = vsub.s32 0, %v555
    %v557 = vrot.slane %v553, %v556
    %v574 = vunpack.c.l.b16 %v537
    %v575 = vunpack.c.l.b16 %v538
    %v576 = vunpack.c.l.b16 %v539
    %v577 = vunpack.c.l.b16 %v540
    %v578 = vunpack.c.l.b16 %v541
    %v579 = vunpack.c.l.b16 %v542
    %v580 = vunpack.c.l.b16 %v543
    %v581 = vunpack.c.l.b16 %v544
    %v582 = vunpack.c.l.b16 %v545
    %v583 = vunpack.c.l.b16 %v546
    %v584 = vunpack.c.l.b16 %v547
    %v585 = vunpack.c.l.b16 %v548
    %v586 = vunpack.c.l.b16 %v549
    %v587 = vunpack.c.l.b16 %v550
    %v588 = vunpack.c.l.b16 %v551
    %v589 = vunpack.c.l.b16 %v552
    %v590 = vpack.c.b16 %v575, %v574
    %v591 = vpack.c.b16 %v577, %v576
    %v592 = vpack.c.b16 %v579, %v578
    %v593 = vpack.c.b16 %v581, %v580
    %v594 = vpack.c.b16 %v583, %v582
    %v595 = vpack.c.b16 %v585, %v584
    %v596 = vpack.c.b16 %v587, %v586
    %v597 = vpack.c.b16 %v589, %v588
    %606 = vmatprep.subr.bf16.mxu0 0
    %607 = vmatpush1.bf16.msra.mxu0 %v597
    %608 = vmatprep.subr.bf16.mxu0 0
    %609 = vmatpush1.bf16.msra.mxu0 %v596
    %610 = vmatprep.subr.bf16.mxu0 0
    %611 = vmatpush1.bf16.msra.mxu0 %v595
    %612 = vmatprep.subr.bf16.mxu0 0
    %613 = vmatpush1.bf16.msra.mxu0 %v594
    %614 = vmatprep.subr.bf16.mxu0 0
    %615 = vmatpush1.bf16.msra.mxu0 %v593
    %616 = vmatprep.subr.bf16.mxu0 0
    %617 = vmatpush1.bf16.msra.mxu0 %v592
    %618 = vmatprep.subr.bf16.mxu0 0
    %619 = vmatpush1.bf16.msra.mxu0 %v591
    %620 = vmatprep.subr.bf16.mxu0 0
    %621 = vmatpush1.bf16.msra.mxu0 %v590
    %622 = vmatprep.subr.bf16.mxu0 0
    %623 = vmatpush2.bf16.msra.mxu0 0
    %624 = vmatprep.subr.bf16.mxu0 0
    %625 = vmatpush2.bf16.msra.mxu0 0
    %626 = vmatprep.subr.bf16.mxu0 0
    %627 = vmatpush2.bf16.msra.mxu0 0
    %628 = vmatprep.subr.bf16.mxu0 0
    %629 = vmatpush2.bf16.msra.mxu0 0
    %630 = vmatprep.subr.bf16.mxu0 0
    %631 = vmatpush2.bf16.msra.mxu0 0
    %632 = vmatprep.subr.bf16.mxu0 0
    %633 = vmatpush2.bf16.msra.mxu0 0
    %634 = vmatprep.subr.bf16.mxu0 0
    %635 = vmatpush2.bf16.msra.mxu0 0
    %636 = vmatprep.subr.bf16.mxu0 0
    %637 = vmatpush2.bf16.msra.mxu0 0
    %638 = vmatprep.mubr.bf16.mxu0 0
    %639 = vmatmul.mubr.bf16.gmra.mxu0 %v535
    %v640 = vpop.f32.mrf.mxu0
    %v641 = vadd.f32 %v557, %v640
    %v642 = vpop.f32.mrf.mxu0
    %v643 = vpop.f32.mrf.mxu0
    %v644 = vadd.f32 %v557, %v643
    %v645 = vpop.f32.mrf.mxu0
    %646 = vdwg.mxu0
    %v647 = vtanh.pop %v641
    %v648 = vtanh.pop %v644
    %v649 = vadd.f32 %v533, %v647
    %v650 = vadd.f32 %v534, %v648
    %651 = vst [vmem:[#allocation8] sm:$0xff] %v649
    %652 = vst [vmem:[#allocation8 + $0x8] sm:$0xff] %v650
    // Predicated region
    $region26: #{tpu_custom_call.1} parent=1 // pred_check
      _
    $region27: #{tpu_custom_call.1} parent=1 // pred_check_branch
      %654 = sbr.rel (0) target = $region29
    $region28: #{tpu_custom_call.1} parent=1 // pred_region
      %s656 = ssub.s32 256, 256
      %657 = vsyncadd [#allocation4], %s656
      %s658 = sshll.u32 [#allocation8], 4
      %s659 = int_to_ptr.vmem [resolvable:$true] %s658
      %664 = dma.vmem_to_hbm [thread:$0]  %s659, 256, %s3, [#allocation4], 128, 128, 8
    $region29: #{tpu_custom_call.1} parent=1 // pred_fallthru
      _
    // Predicated region
    $region30: #{tpu_custom_call.1} parent=1 // pred_check
      _
    $region31: #{tpu_custom_call.1} parent=1 // pred_check_branch
      %666 = sbr.rel (0) target = $region33
    $region32: #{tpu_custom_call.1} parent=1 // pred_region
      %667 = dma.done [#allocation4], 256
    $region33: #{tpu_custom_call.1} parent=1 // pred_fallthru
      _
    %668 = vsyncpa [#allocation3], 1
    %669 = vsyncpa [#allocation6], 1
    %670 = vsyncpa [#allocation4], 1

</llo_original>
